<compile_context>
chip_gen: v7x
topology: tpu7x:2x2x1
jax: 0.10.0
libtpu: 0.0.40
codegen_flags: <defaults>
</compile_context>

<pallas_src>
import functools

import jax
import jax.numpy as jnp
from jax.experimental import pallas as pl
from jax.experimental.pallas import tpu as pltpu

BOHR_TO_ANSTROM = 0.52917721092  # same constant as torchanipbe0


def _vdw_kernel(c6_ref, c8_ref, c10_ref, out_ref, *, b0, b1):
    # Compute in f32 regardless of input dtype (v5e VPU/EUP have no bf16 path).
    c6 = c6_ref[...].astype(jnp.float32)
    c8 = c8_ref[...].astype(jnp.float32)
    c10 = c10_ref[...].astype(jnp.float32)

    t1 = jnp.sqrt(c8 / c6)    # (c8/c6)**0.5
    t3 = jnp.sqrt(c10 / c8)   # (c10/c8)**0.5
    t2 = jnp.sqrt(t1 * t3)    # (c10/c6)**0.25 == sqrt(sqrt(c8/c6)*sqrt(c10/c8))

    r_critical = (t1 + t2 + t3) * jnp.float32(1.0 / 3.0)

    out_ref[...] = (
        jnp.float32(b0) + jnp.float32(b1 * BOHR_TO_ANSTROM) * r_critical
    ).astype(out_ref.dtype)


def _vmem_capacity_bytes():
    try:
        return int(pltpu.get_tpu_info().vmem_capacity_bytes)
    except Exception:
        return 64 << 20  # conservative: v7x per-TC VMEM


def vanderwaals_layer(c6, c8, c10, *, b0, b1, chunk=4096, block_rows=None,
                      out_dtype=None):
    """Pallas implementation of vanderWaalsLayer.forward.

    c6, c8, c10: [n_batch, n_interaction] float arrays (any shape works; they
                 are flattened to a lane-dense slab internally).
    returns:     same shape as inputs (out_dtype or input dtype).
    """
    assert c6.shape == c8.shape == c10.shape
    assert chunk % 128 == 0, "chunk must be a multiple of 128 (lane width)"

    orig_shape = c6.shape
    out_dtype = jnp.dtype(out_dtype) if out_dtype is not None else jnp.dtype(c6.dtype)

    total = 1
    for d in orig_shape:
        total *= int(d)

    # --- flatten to a lane-dense (rows, chunk) slab; pad the tail with ones
    #     (benign for the ratios; padded outputs are discarded). ---
    pad = (-total) % chunk

    def to_slab(x):
        xf = x.reshape(-1)
        if pad:
            xf = jnp.pad(xf, (0, pad), constant_values=1.0)
        return xf.reshape(-1, chunk)

    c6s, c8s, c10s = to_slab(c6), to_slab(c8), to_slab(c10)
    n_rows = (total + pad) // chunk

    # --- tile-size selection: target ~4 MiB tiles, clamp to physical VMEM ---
    in_itemsize = jnp.dtype(c6.dtype).itemsize
    out_itemsize = out_dtype.itemsize
    if block_rows is None:
        block_rows = max(8, (4 << 20) // (chunk * in_itemsize))  # ~4 MiB tile

    # Double-buffered footprint per tile row: (3 inputs + 1 output) x 2 buffers.
    bytes_per_tile_row = 2 * chunk * (3 * in_itemsize + out_itemsize)
    vmem_cap = _vmem_capacity_bytes()
    budget = max(vmem_cap - (8 << 20), 8 << 20)
    max_rows = max(8, (budget // bytes_per_tile_row) // 8 * 8)
    block_rows = min(int(block_rows), int(max_rows))

    if block_rows >= n_rows:
        block_rows = n_rows                        # full extent -> always legal
    else:
        block_rows = max(8, (block_rows // 8) * 8)  # keep (8,128)-divisible

    grid = (pl.cdiv(n_rows, block_rows),)           # ragged last block is OK
    spec = pl.BlockSpec((block_rows, chunk), lambda r: (r, 0))

    vmem_limit = bytes_per_tile_row * block_rows + (4 << 20)
    vmem_limit = min(vmem_limit, max(vmem_cap - (2 << 20), 16 << 20))
    vmem_limit = max(vmem_limit, 16 << 20)

    kernel = functools.partial(_vdw_kernel, b0=float(b0), b1=float(b1))

    out_slab = pl.pallas_call(
        kernel,
        out_shape=jax.ShapeDtypeStruct((n_rows, chunk), out_dtype),
        grid_spec=pltpu.PrefetchScalarGridSpec(
            num_scalar_prefetch=0,
            grid=grid,
            in_specs=[spec, spec, spec],
            out_specs=spec,
        ),
        compiler_params=pltpu.CompilerParams(
            dimension_semantics=("parallel",),
            vmem_limit_bytes=int(vmem_limit),
        ),
    )(c6s, c8s, c10s)

    out = out_slab.reshape(-1)
    if pad:
        out = out[:total]
    return out.reshape(orig_shape)


def vanderwaals_layer_ref(c6, c8, c10, *, b0, b1):
    r_critical = ((c8 / c6) ** 0.5 + (c10 / c6) ** 0.25 + (c10 / c8) ** 0.5) / 3
    return b0 + b1 * r_critical * BOHR_TO_ANSTROM


if __name__ == "__main__":
    key = jax.random.PRNGKey(0)
    k1, k2, k3 = jax.random.split(key, 3)

    n_batch, n_interaction = 8, 256
    b0, b1 = 3.26, 1.15  # damping-function parameters of the layer

    # Dispersion coefficients are strictly positive (c6 < c8 < c10 in magnitude).
    c6 = jax.random.uniform(k1, (n_batch, n_interaction),
                            dtype=jnp.float32, minval=1.0, maxval=10.0)
    c8 = jax.random.uniform(k2, (n_batch, n_interaction),
                            dtype=jnp.float32, minval=10.0, maxval=100.0)
    c10 = jax.random.uniform(k3, (n_batch, n_interaction),
                             dtype=jnp.float32, minval=100.0, maxval=1000.0)

    out = vanderwaals_layer(c6, c8, c10, b0=b0, b1=b1)
    ref = vanderwaals_layer_ref(c6, c8, c10, b0=b0, b1=b1)

    jax.block_until_ready(out)

    assert out.shape == (n_batch, n_interaction)
    assert out.dtype == c6.dtype
    assert jnp.allclose(out, ref, rtol=1e-5, atol=1e-6), (out, ref)

    print("KERNEL_OK")
</pallas_src>

<mosaic_0001>
module attributes {stable_mosaic.version = 11 : i64} {
  func.func @_vdw_kernel(%arg0: i32, %arg1: memref<1x4096xf32, #tpu.memory_space<vmem>>, %arg2: memref<1x4096xf32, #tpu.memory_space<vmem>>, %arg3: memref<1x4096xf32, #tpu.memory_space<vmem>>, %arg4: memref<1x4096xf32, #tpu.memory_space<vmem>>) attributes {dimension_semantics = [#tpu.dimension_semantics<parallel>], iteration_bounds = array<i64: 1>, scalar_prefetch = 0 : i64, scratch_operands = 0 : i64, tpu.core_type = #tpu.core_type<tc>, window_params = [{transform_indices = @transform_0, window_bounds = array<i64: 1, 4096>}, {transform_indices = @transform_1, window_bounds = array<i64: 1, 4096>}, {transform_indices = @transform_2, window_bounds = array<i64: 1, 4096>}, {transform_indices = @transform_3, window_bounds = array<i64: 1, 4096>}]} {
    %c0 = arith.constant 0 : index
    %c0_0 = arith.constant 0 : index
    %0 = vector.load %arg1[%c0, %c0_0] : memref<1x4096xf32, #tpu.memory_space<vmem>>, vector<1x4096xf32>
    %c0_1 = arith.constant 0 : index
    %c0_2 = arith.constant 0 : index
    %1 = vector.load %arg2[%c0_1, %c0_2] : memref<1x4096xf32, #tpu.memory_space<vmem>>, vector<1x4096xf32>
    %c0_3 = arith.constant 0 : index
    %c0_4 = arith.constant 0 : index
    %2 = vector.load %arg3[%c0_3, %c0_4] : memref<1x4096xf32, #tpu.memory_space<vmem>>, vector<1x4096xf32>
    %3 = arith.divf %1, %0 : vector<1x4096xf32>
    %4 = math.sqrt %3 : vector<1x4096xf32>
    %5 = arith.divf %2, %1 : vector<1x4096xf32>
    %6 = math.sqrt %5 : vector<1x4096xf32>
    %7 = arith.mulf %4, %6 : vector<1x4096xf32>
    %8 = math.sqrt %7 : vector<1x4096xf32>
    %9 = arith.addf %4, %8 : vector<1x4096xf32>
    %10 = arith.addf %9, %6 : vector<1x4096xf32>
    %cst = arith.constant 0.333333343 : f32
    %11 = vector.broadcast %cst : f32 to vector<1x4096xf32>
    %12 = arith.mulf %10, %11 : vector<1x4096xf32>
    %cst_5 = arith.constant 0.608553767 : f32
    %13 = vector.broadcast %cst_5 : f32 to vector<1x4096xf32>
    %14 = arith.mulf %13, %12 : vector<1x4096xf32>
    %cst_6 = arith.constant 3.260000e+00 : f32
    %15 = vector.broadcast %cst_6 : f32 to vector<1x4096xf32>
    %16 = arith.addf %15, %14 : vector<1x4096xf32>
    %c0_7 = arith.constant 0 : index
    %c0_8 = arith.constant 0 : index
    %17 = vector.load %arg4[%c0_7, %c0_8] : memref<1x4096xf32, #tpu.memory_space<vmem>>, vector<1x4096xf32>
    tpu.vector_store %arg4[%c0_7, %c0_8], %16 {strides = array<i32>} : memref<1x4096xf32, #tpu.memory_space<vmem>>, vector<1x4096xf32>,
    return
  }
  func.func @transform_0(%arg0: i32) -> (i32, i32) {
    %c0_i32 = arith.constant 0 : i32
    %c0_i32_0 = arith.constant 0 : i32
    return %arg0, %c0_i32 : i32, i32
  }
  func.func @transform_1(%arg0: i32) -> (i32, i32) {
    %c0_i32 = arith.constant 0 : i32
    %c0_i32_0 = arith.constant 0 : i32
    return %arg0, %c0_i32 : i32, i32
  }
  func.func @transform_2(%arg0: i32) -> (i32, i32) {
    %c0_i32 = arith.constant 0 : i32
    %c0_i32_0 = arith.constant 0 : i32
    return %arg0, %c0_i32 : i32, i32
  }
  func.func @transform_3(%arg0: i32) -> (i32, i32) {
    %c0_i32 = arith.constant 0 : i32
    %c0_i32_0 = arith.constant 0 : i32
    return %arg0, %c0_i32 : i32, i32
  }
}

</mosaic_0001>

<llo_original>
// kernel: tpu_custom_call.1
$region0: #{tpu_custom_call.1}
  #allocation0 [shape = 'u32[]', space=smem, size = 0x4, offset = 0x4, fixed_abs, tag = 'smem constant byte address 0x4 - core index']
  #allocation1 [shape = 'u32[144,128]{1,0:T(1,128)}', space=vmem, size = 0x12000, scoped, tag = 'internal scratch']
  %s0 = inlined_call_operand.hbm [shape: f32[1,4096], index: 0, kind: input, shape index: {}]
  %s1 = inlined_call_operand.hbm [shape: f32[1,4096], index: 1, kind: input, shape index: {}]
  %s2 = inlined_call_operand.hbm [shape: f32[1,4096], index: 2, kind: input, shape index: {}]
  %s3 = inlined_call_operand.hbm [shape: f32[1,4096], index: 3, kind: output, shape index: {}]
  %s4 = sld [smem:[#allocation0]]
  $region34: #{tpu_custom_call.1} parent=0
    _
  %s6 = ssub.s32 1, %s4
  %s7 = scalar_select 0, %s6, %s4
  $region1: #{tpu_custom_call.1} parent=0
    #allocation2 [shape = 'u8[16384]{0}', space=vmem, size = 0x4000, scoped, tag = 'input window, operand 0, single buffered']
    #allocation3 [shape = 's32[1]{0}', space=sflag, size = 0x4, scoped, tag = 'scoped memory for tpu_custom_call.1']
    #allocation4 [shape = 's32[1]{0}', space=sflag, size = 0x4, scoped, tag = 'scoped memory for tpu_custom_call.1']
    #allocation5 [shape = 'u8[16384]{0}', space=vmem, size = 0x4000, scoped, tag = 'input window, operand 1, single buffered']
    #allocation6 [shape = 's32[1]{0}', space=sflag, size = 0x4, scoped, tag = 'scoped memory for tpu_custom_call.1']
    #allocation7 [shape = 'u8[16384]{0}', space=vmem, size = 0x4000, scoped, tag = 'input window, operand 2, single buffered']
    #allocation8 [shape = 'u8[16384]{0}', space=vmem, size = 0x4000, scoped, tag = 'output window, operand 0, single buffered']
    %8 = vsyncpa [#allocation3], 0
    %9 = vsyncpa [#allocation6], 0
    %10 = vsyncpa [#allocation4], 0
    // Predicated region
    $region2: #{tpu_custom_call.1} parent=1 // pred_check
      _
    $region3: #{tpu_custom_call.1} parent=1 // pred_check_branch
      %12 = sbr.rel (0) target = $region5
    $region4: #{tpu_custom_call.1} parent=1 // pred_region
      %s14 = ssub.s32 512, 512
      %15 = vsyncadd [#allocation3], %s14
      %s17 = sshll.u32 [#allocation2], 4
      %s18 = int_to_ptr.vmem [resolvable:$true] %s17
      %20 = dma.hbm_to_vmem [thread:$0]  %s0, 512, %s18, [#allocation3]
    $region5: #{tpu_custom_call.1} parent=1 // pred_fallthru
      _
    // Predicated region
    $region6: #{tpu_custom_call.1} parent=1 // pred_check
      _
    $region7: #{tpu_custom_call.1} parent=1 // pred_check_branch
      %22 = sbr.rel (0) target = $region9
    $region8: #{tpu_custom_call.1} parent=1 // pred_region
      %s24 = ssub.s32 512, 512
      %25 = vsyncadd [#allocation6], %s24
      %s27 = sshll.u32 [#allocation5], 4
      %s28 = int_to_ptr.vmem [resolvable:$true] %s27
      %30 = dma.hbm_to_vmem [thread:$0]  %s1, 512, %s28, [#allocation6]
    $region9: #{tpu_custom_call.1} parent=1 // pred_fallthru
      _
    // Predicated region
    $region10: #{tpu_custom_call.1} parent=1 // pred_check
      _
    $region11: #{tpu_custom_call.1} parent=1 // pred_check_branch
      %32 = sbr.rel (0) target = $region13
    $region12: #{tpu_custom_call.1} parent=1 // pred_region
      %s34 = ssub.s32 512, 512
      %35 = vsyncadd [#allocation6], %s34
      %s37 = sshll.u32 [#allocation7], 4
      %s38 = int_to_ptr.vmem [resolvable:$true] %s37
      %40 = dma.hbm_to_vmem [thread:$0]  %s2, 512, %s38, [#allocation6]
    $region13: #{tpu_custom_call.1} parent=1 // pred_fallthru
      _
    // Predicated region
    $region14: #{tpu_custom_call.1} parent=1 // pred_check
      _
    $region15: #{tpu_custom_call.1} parent=1 // pred_check_branch
      %42 = sbr.rel (0) target = $region17
    $region16: #{tpu_custom_call.1} parent=1 // pred_region
      %43 = dma.done [#allocation3], 512
    $region17: #{tpu_custom_call.1} parent=1 // pred_fallthru
      _
    // Predicated region
    $region18: #{tpu_custom_call.1} parent=1 // pred_check
      _
    $region19: #{tpu_custom_call.1} parent=1 // pred_check_branch
      %45 = sbr.rel (0) target = $region21
    $region20: #{tpu_custom_call.1} parent=1 // pred_region
      %46 = dma.done [#allocation6], 512
    $region21: #{tpu_custom_call.1} parent=1 // pred_fallthru
      _
    // Predicated region
    $region22: #{tpu_custom_call.1} parent=1 // pred_check
      _
    $region23: #{tpu_custom_call.1} parent=1 // pred_check_branch
      %48 = sbr.rel (0) target = $region25
    $region24: #{tpu_custom_call.1} parent=1 // pred_region
      %49 = dma.done [#allocation6], 512
    $region25: #{tpu_custom_call.1} parent=1 // pred_fallthru
      _
    %v50 = vld [vmem:[#allocation2] sm:$0xff]
    %v51 = vld [vmem:[#allocation2 + $0x8] sm:$0xff]
    %v52 = vld [vmem:[#allocation2 + $0x10] sm:$0xff]
    %v53 = vld [vmem:[#allocation2 + $0x18] sm:$0xff]
    %v54 = vld [vmem:[#allocation5] sm:$0xff]
    %v55 = vld [vmem:[#allocation5 + $0x8] sm:$0xff]
    %v56 = vld [vmem:[#allocation5 + $0x10] sm:$0xff]
    %v57 = vld [vmem:[#allocation5 + $0x18] sm:$0xff]
    %v58 = vld [vmem:[#allocation7] sm:$0xff]
    %v59 = vld [vmem:[#allocation7 + $0x8] sm:$0xff]
    %v60 = vld [vmem:[#allocation7 + $0x10] sm:$0xff]
    %v61 = vld [vmem:[#allocation7 + $0x18] sm:$0xff]
    %v62 = vrcp.pop %v50
    %v63 = vmul.f32 %v54, %v62
    %v64 = vrcp.pop %v51
    %v65 = vmul.f32 %v55, %v64
    %v66 = vrcp.pop %v52
    %v67 = vmul.f32 %v56, %v66
    %v68 = vrcp.pop %v53
    %v69 = vmul.f32 %v57, %v68
    %v70 = vrsqrt.pop %v63
    %v71 = vmul.f32 %v63, %v70
    %vm72 = vcmp.eq.f32.partialorder %v63, inf
    %v73 = vsel %vm72, %v63, %v71
    %vm74 = vcmp.eq.f32.partialorder %v63, 0.0
    %v75 = vand.u32 %v63, 2147483648
    %v76 = vsel %vm74, %v75, %v73
    %v77 = vrsqrt.pop %v65
    %v78 = vmul.f32 %v65, %v77
    %vm79 = vcmp.eq.f32.partialorder %v65, inf
    %v80 = vsel %vm79, %v65, %v78
    %vm81 = vcmp.eq.f32.partialorder %v65, 0.0
    %v82 = vand.u32 %v65, 2147483648
    %v83 = vsel %vm81, %v82, %v80
    %v84 = vrsqrt.pop %v67
    %v85 = vmul.f32 %v67, %v84
    %vm86 = vcmp.eq.f32.partialorder %v67, inf
    %v87 = vsel %vm86, %v67, %v85
    %vm88 = vcmp.eq.f32.partialorder %v67, 0.0
    %v89 = vand.u32 %v67, 2147483648
    %v90 = vsel %vm88, %v89, %v87
    %v91 = vrsqrt.pop %v69
    %v92 = vmul.f32 %v69, %v91
    %vm93 = vcmp.eq.f32.partialorder %v69, inf
    %v94 = vsel %vm93, %v69, %v92
    %vm95 = vcmp.eq.f32.partialorder %v69, 0.0
    %v96 = vand.u32 %v69, 2147483648
    %v97 = vsel %vm95, %v96, %v94
    %v98 = vrcp.pop %v54
    %v99 = vmul.f32 %v58, %v98
    %v100 = vrcp.pop %v55
    %v101 = vmul.f32 %v59, %v100
    %v102 = vrcp.pop %v56
    %v103 = vmul.f32 %v60, %v102
    %v104 = vrcp.pop %v57
    %v105 = vmul.f32 %v61, %v104
    %v106 = vrsqrt.pop %v99
    %v107 = vmul.f32 %v99, %v106
    %vm108 = vcmp.eq.f32.partialorder %v99, inf
    %v109 = vsel %vm108, %v99, %v107
    %vm110 = vcmp.eq.f32.partialorder %v99, 0.0
    %v111 = vand.u32 %v99, 2147483648
    %v112 = vsel %vm110, %v111, %v109
    %v113 = vrsqrt.pop %v101
    %v114 = vmul.f32 %v101, %v113
    %vm115 = vcmp.eq.f32.partialorder %v101, inf
    %v116 = vsel %vm115, %v101, %v114
    %vm117 = vcmp.eq.f32.partialorder %v101, 0.0
    %v118 = vand.u32 %v101, 2147483648
    %v119 = vsel %vm117, %v118, %v116
    %v120 = vrsqrt.pop %v103
    %v121 = vmul.f32 %v103, %v120
    %vm122 = vcmp.eq.f32.partialorder %v103, inf
    %v123 = vsel %vm122, %v103, %v121
    %vm124 = vcmp.eq.f32.partialorder %v103, 0.0
    %v125 = vand.u32 %v103, 2147483648
    %v126 = vsel %vm124, %v125, %v123
    %v127 = vrsqrt.pop %v105
    %v128 = vmul.f32 %v105, %v127
    %vm129 = vcmp.eq.f32.partialorder %v105, inf
    %v130 = vsel %vm129, %v105, %v128
    %vm131 = vcmp.eq.f32.partialorder %v105, 0.0
    %v132 = vand.u32 %v105, 2147483648
    %v133 = vsel %vm131, %v132, %v130
    %v134 = vmul.f32 %v76, %v112
    %v135 = vmul.f32 %v83, %v119
    %v136 = vmul.f32 %v90, %v126
    %v137 = vmul.f32 %v97, %v133
    %v138 = vrsqrt.pop %v134
    %v139 = vmul.f32 %v134, %v138
    %vm140 = vcmp.eq.f32.partialorder %v134, inf
    %v141 = vsel %vm140, %v134, %v139
    %vm142 = vcmp.eq.f32.partialorder %v134, 0.0
    %v143 = vand.u32 %v134, 2147483648
    %v144 = vsel %vm142, %v143, %v141
    %v145 = vrsqrt.pop %v135
    %v146 = vmul.f32 %v135, %v145
    %vm147 = vcmp.eq.f32.partialorder %v135, inf
    %v148 = vsel %vm147, %v135, %v146
    %vm149 = vcmp.eq.f32.partialorder %v135, 0.0
    %v150 = vand.u32 %v135, 2147483648
    %v151 = vsel %vm149, %v150, %v148
    %v152 = vrsqrt.pop %v136
    %v153 = vmul.f32 %v136, %v152
    %vm154 = vcmp.eq.f32.partialorder %v136, inf
    %v155 = vsel %vm154, %v136, %v153
    %vm156 = vcmp.eq.f32.partialorder %v136, 0.0
    %v157 = vand.u32 %v136, 2147483648
    %v158 = vsel %vm156, %v157, %v155
    %v159 = vrsqrt.pop %v137
    %v160 = vmul.f32 %v137, %v159
    %vm161 = vcmp.eq.f32.partialorder %v137, inf
    %v162 = vsel %vm161, %v137, %v160
    %vm163 = vcmp.eq.f32.partialorder %v137, 0.0
    %v164 = vand.u32 %v137, 2147483648
    %v165 = vsel %vm163, %v164, %v162
    %v166 = vadd.f32 %v76, %v144
    %v167 = vadd.f32 %v83, %v151
    %v168 = vadd.f32 %v90, %v158
    %v169 = vadd.f32 %v97, %v165
    %v170 = vadd.f32 %v166, %v112
    %v171 = vadd.f32 %v167, %v119
    %v172 = vadd.f32 %v168, %v126
    %v173 = vadd.f32 %v169, %v133
    %v174 = vmul.f32 %v170, 0.33333334
    %v175 = vmul.f32 %v171, 0.33333334
    %v176 = vmul.f32 %v172, 0.33333334
    %v177 = vmul.f32 %v173, 0.33333334
    %v178 = vmul.f32 %v174, 0.60855377
    %v179 = vmul.f32 %v175, 0.60855377
    %v180 = vmul.f32 %v176, 0.60855377
    %v181 = vmul.f32 %v177, 0.60855377
    %v182 = vadd.f32 %v178, 3.26
    %v183 = vadd.f32 %v179, 3.26
    %v184 = vadd.f32 %v180, 3.26
    %v185 = vadd.f32 %v181, 3.26
    %186 = vst [vmem:[#allocation8] sm:$0xff] %v182
    %187 = vst [vmem:[#allocation8 + $0x8] sm:$0xff] %v183
    %188 = vst [vmem:[#allocation8 + $0x10] sm:$0xff] %v184
    %189 = vst [vmem:[#allocation8 + $0x18] sm:$0xff] %v185
    // Predicated region
    $region26: #{tpu_custom_call.1} parent=1 // pred_check
      _
    $region27: #{tpu_custom_call.1} parent=1 // pred_check_branch
      %191 = sbr.rel (0) target = $region29
    $region28: #{tpu_custom_call.1} parent=1 // pred_region
      %s193 = ssub.s32 512, 512
      %194 = vsyncadd [#allocation4], %s193
      %s196 = sshll.u32 [#allocation8], 4
      %s197 = int_to_ptr.vmem [resolvable:$true] %s196
      %199 = dma.vmem_to_hbm [thread:$0]  %s197, 512, %s3, [#allocation4]
    $region29: #{tpu_custom_call.1} parent=1 // pred_fallthru
      _
    // Predicated region
    $region30: #{tpu_custom_call.1} parent=1 // pred_check
      _
    $region31: #{tpu_custom_call.1} parent=1 // pred_check_branch
      %201 = sbr.rel (0) target = $region33
    $region32: #{tpu_custom_call.1} parent=1 // pred_region
      %202 = dma.done [#allocation4], 512
    $region33: #{tpu_custom_call.1} parent=1 // pred_fallthru
      _
    %203 = vsyncpa [#allocation3], 1
    %204 = vsyncpa [#allocation6], 1
    %205 = vsyncpa [#allocation4], 1

</llo_original>
